<compile_context>
chip_gen: v7x
topology: tpu7x:2x2x1
jax: 0.10.0
libtpu: 0.0.40
codegen_flags: <defaults>
</compile_context>

<pallas_src>
import jax
import jax.numpy as jnp
from jax import lax
from jax.experimental import pallas as pl
from jax.experimental.pallas import tpu as pltpu

_EPS = 1e-5  # torch.nn.LayerNorm default

# Per-step live-VMEM budget: 2x double-buffered input tile + 2x output tile +
# ~4 f32 compute temporaries.  ~20 MiB keeps headroom on v7x (64 MiB physical)
# while still amortizing the ~0.35 us per-grid-step overhead.
_VMEM_TILE_BUDGET = 20 * 1024 * 1024
# Above the scoped defaults (16 MiB v5e, 32 MiB v6e/v7x), below v7x physical.
_VMEM_LIMIT_BYTES = 40 * 1024 * 1024


def _f32(ref):
    return ref[...].astype(jnp.float32)


def _patch_embed_norm_tile_kernel(x_ref, w_ref, b_ref, o_ref):
    """LayerNorm over channels for one lane-dense (C, TL) tile."""
    x = _f32(x_ref)                                    # (C, TL)
    mean = jnp.mean(x, axis=0, keepdims=True)          # (1, TL)
    xc = x - mean
    var = jnp.mean(xc * xc, axis=0, keepdims=True)     # biased, matches torch LN
    y = xc * lax.rsqrt(var + _EPS) * _f32(w_ref) + _f32(b_ref)
    o_ref[...] = y.astype(o_ref.dtype)


def _patch_embed_norm_batch_kernel(x_ref, w_ref, b_ref, o_ref):
    """LayerNorm + T<->C permute for one full (T, C, HW) batch element."""
    x = _f32(x_ref)                                    # (T, C, HW)
    mean = jnp.mean(x, axis=1, keepdims=True)          # reduce over C (sublanes)
    xc = x - mean
    var = jnp.mean(xc * xc, axis=1, keepdims=True)
    y = xc * lax.rsqrt(var + _EPS) * _f32(w_ref) + _f32(b_ref)    # (T, C, HW)
    # Leading<->sublane swap (lane dim untouched); hidden under the output DMA.
    o_ref[...] = pltpu.einshape("tcl->ctl", y).astype(o_ref.dtype)


def _select_lane_tile(hw, c, itemsize):
    """Lane tile for the aligned path (requires hw % 128 == 0, or TL == hw).

    Prefers TL == HW (one contiguous (C, HW) input slab per (n, t)); otherwise
    the largest 128-multiple divisor of HW whose working set fits the budget.
    """
    bytes_per_lane = 4 * c * itemsize + 4 * c * 4      # dbl-buffered I/O + f32 temps
    max_tl = max(_VMEM_TILE_BUDGET // bytes_per_lane, 128)
    if hw <= max_tl:
        return hw
    tl = min(max((max_tl // 128) * 128, 128), hw)
    while tl > 128 and hw % tl != 0:
        tl -= 128
    return tl


def _layernorm_ref(xl, weight, bias):
    # xl: (..., C); pure-JAX LayerNorm over the last axis (torch-equivalent).
    xf = xl.astype(jnp.float32)
    mean = xf.mean(-1, keepdims=True)
    var = ((xf - mean) ** 2).mean(-1, keepdims=True)
    return ((xf - mean) * lax.rsqrt(var + _EPS) * weight + bias).astype(xl.dtype)


def _patch_embed_ref(x, weight, bias):
    # Pure-JAX reference of the torch forward (with norm).
    N, T, C, H, W = x.shape
    xp = jnp.transpose(x, (0, 2, 1, 3, 4))
    xl = xp.reshape(N, C, T * H * W).swapaxes(1, 2)
    return _layernorm_ref(xl, weight, bias).swapaxes(1, 2).reshape(N, C, T, H, W)


def patch_embed(x, weight=None, bias=None):
    """Forward of PatchEmbed. x: (N, T, C, H, W) -> (N, C, T, H, W).

    weight/bias: optional (C,) LayerNorm affine params (norm_layer case).
    """
    N, T, C, H, W = x.shape
    HW = H * W

    if weight is None:
        # norm_layer=None: pure permute, zero FLOPs.  A Pallas kernel here would
        # only add an HBM round trip; let XLA fuse the transpose into the consumer.
        return jnp.transpose(x, (0, 2, 1, 3, 4))

    if bias is None:
        bias = jnp.zeros_like(weight)      # robustness: affine weight w/o bias

    itemsize = jnp.dtype(x.dtype).itemsize
    x4 = x.reshape(N, T, C, HW)            # free reshape (contiguous merge of H, W)
    cost = pl.CostEstimate(
        flops=7 * N * T * C * HW,
        transcendentals=N * T * HW,
        bytes_accessed=2 * N * T * C * HW * itemsize + 2 * C * 4,
    )
    cparams = dict(vmem_limit_bytes=_VMEM_LIMIT_BYTES)

    if HW % 128 == 0:
        # ---------- lane-aligned path: permute purely via output placement ----------
        TL = _select_lane_tile(HW, C, itemsize)
        n_l = HW // TL
        if N * T * n_l < 2 and HW % 256 == 0:
            # Keep >=2 grid steps so v7x's two TensorCores both get work.
            TL, n_l = HW // 2, 2
        w2 = weight.reshape(C, 1)
        b2 = bias.reshape(C, 1)
        # TODO(synk): where TL is forced small (huge C), sweep pl.Buffered(3) on the
        # I/O BlockSpecs to hide short-row DMA latency (few-% at most).
        out_flat = pl.pallas_call(
            _patch_embed_norm_tile_kernel,
            out_shape=jax.ShapeDtypeStruct((N, C, T * HW), x.dtype),
            grid_spec=pltpu.PrefetchScalarGridSpec(
                num_scalar_prefetch=0,
                grid=(N, T, n_l),
                in_specs=[
                    pl.BlockSpec((pl.Squeezed(), pl.Squeezed(), C, TL),
                                 lambda n, t, l: (n, t, 0, l)),
                    pl.BlockSpec((C, 1), lambda n, t, l: (0, 0)),   # LN weight
                    pl.BlockSpec((C, 1), lambda n, t, l: (0, 0)),   # LN bias
                ],
                # T<->C "transpose" happens via placement: lane-block t*n_l + l
                # of the flattened (N, C, T*HW) output.
                out_specs=pl.BlockSpec((pl.Squeezed(), C, TL),
                                       lambda n, t, l: (n, 0, t * n_l + l)),
            ),
            compiler_params=pltpu.CompilerParams(
                dimension_semantics=("parallel", "parallel", "parallel"),
                **cparams,
            ),
            cost_estimate=cost,
        )(x4, w2, b2)
        return out_flat.reshape(N, C, T, H, W)     # free reshape

    # ---------- lane-unaligned HW (e.g. 14*14 = 196): full per-batch blocks ----------
    # Full-dim blocks are exempt from the (8,128) divisibility rule, so one grid
    # step handles a whole (T, C, HW) batch element and writes the permuted
    # (C, T, HW) slab; still exactly one HBM round trip.
    live_bytes = T * C * HW * (4 * itemsize + 3 * 4)
    if live_bytes > _VMEM_TILE_BUDGET:
        # TODO(synk): add a tiled Pallas path (e.g. C-chunked blocks) for
        # unaligned H*W too large to fit a whole batch element in VMEM.
        xl = jnp.transpose(x, (0, 2, 1, 3, 4)).reshape(N, C, T * HW).swapaxes(1, 2)
        y = _layernorm_ref(xl, weight, bias)
        return y.swapaxes(1, 2).reshape(N, C, T, H, W)

    w3 = weight.reshape(1, C, 1)
    b3 = bias.reshape(1, C, 1)
    out4 = pl.pallas_call(
        _patch_embed_norm_batch_kernel,
        out_shape=jax.ShapeDtypeStruct((N, C, T, HW), x.dtype),
        grid_spec=pltpu.PrefetchScalarGridSpec(
            num_scalar_prefetch=0,
            grid=(N,),
            in_specs=[
                pl.BlockSpec((pl.Squeezed(), T, C, HW), lambda n: (n, 0, 0, 0)),
                pl.BlockSpec((1, C, 1), lambda n: (0, 0, 0)),       # LN weight
                pl.BlockSpec((1, C, 1), lambda n: (0, 0, 0)),       # LN bias
            ],
            out_specs=pl.BlockSpec((pl.Squeezed(), C, T, HW),
                                   lambda n: (n, 0, 0, 0)),
        ),
        compiler_params=pltpu.CompilerParams(
            dimension_semantics=("parallel",),
            **cparams,
        ),
        cost_estimate=cost,
    )(x4, w3, b3)
    return out4.reshape(N, C, T, H, W)             # free reshape


if __name__ == "__main__":
    key = jax.random.PRNGKey(0)
    kx, kw, kb, kx2 = jax.random.split(key, 4)

    # Small shapes consistent with the module: batch=2, num_frames=3,
    # embed_dim=32.  C is a multiple of 8 (sublane pack); the default
    # embed_dim=96 also is.
    N, T, C = 2, 3, 32
    weight = jax.random.normal(kw, (C,), dtype=jnp.float32)
    bias = jax.random.normal(kb, (C,), dtype=jnp.float32)

    # --- lane-aligned spatial extent: H = W = 16 (H*W = 256) ---
    H = W = 16
    x = jax.random.normal(kx, (N, T, C, H, W), dtype=jnp.float32)
    out = jax.block_until_ready(patch_embed(x, weight, bias))
    ref = _patch_embed_ref(x, weight, bias)
    assert out.shape == (N, C, T, H, W), out.shape
    assert out.dtype == x.dtype
    assert jnp.allclose(out, ref, atol=1e-4, rtol=1e-4), float(
        jnp.max(jnp.abs(out - ref)))

    # --- lane-unaligned spatial extent: H = W = 14 (H*W = 196, ViT 224/16) ---
    H2 = W2 = 14
    x2 = jax.random.normal(kx2, (N, T, C, H2, W2), dtype=jnp.float32)
    out2 = jax.block_until_ready(patch_embed(x2, weight, bias))
    ref2 = _patch_embed_ref(x2, weight, bias)
    assert out2.shape == (N, C, T, H2, W2), out2.shape
    assert jnp.allclose(out2, ref2, atol=1e-4, rtol=1e-4), float(
        jnp.max(jnp.abs(out2 - ref2)))

    # --- norm_layer=None path: pure permute ---
    out3 = jax.block_until_ready(patch_embed(x))
    assert out3.shape == (N, C, T, H, W)
    assert jnp.allclose(out3, jnp.transpose(x, (0, 2, 1, 3, 4)))

    print("KERNEL_OK")
</pallas_src>

<mosaic_0001>
module attributes {stable_mosaic.version = 11 : i64} {
  func.func @_patch_embed_norm_tile_kernel(%arg0: i32, %arg1: i32, %arg2: i32, %arg3: memref<1x1x32x256xf32, #tpu.memory_space<vmem>>, %arg4: memref<32x1xf32, #tpu.memory_space<vmem>>, %arg5: memref<32x1xf32, #tpu.memory_space<vmem>>, %arg6: memref<1x32x256xf32, #tpu.memory_space<vmem>>) attributes {dimension_semantics = [#tpu.dimension_semantics<parallel>, #tpu.dimension_semantics<parallel>, #tpu.dimension_semantics<parallel>], iteration_bounds = array<i64: 2, 3, 1>, scalar_prefetch = 0 : i64, scratch_operands = 0 : i64, tpu.core_type = #tpu.core_type<tc>, window_params = [{transform_indices = @transform_0, window_bounds = array<i64: 1, 1, 32, 256>}, {pipeline_mode = #tpu.pipeline_mode<synchronous>, transform_indices = @transform_1, window_bounds = array<i64: 32, 1>}, {pipeline_mode = #tpu.pipeline_mode<synchronous>, transform_indices = @transform_2, window_bounds = array<i64: 32, 1>}, {transform_indices = @transform_3, window_bounds = array<i64: 1, 32, 256>}]} {
    %c0 = arith.constant 0 : index
    %c0_0 = arith.constant 0 : index
    %c0_1 = arith.constant 0 : index
    %c0_2 = arith.constant 0 : index
    %0 = vector.load %arg3[%c0, %c0_0, %c0_1, %c0_2] : memref<1x1x32x256xf32, #tpu.memory_space<vmem>>, vector<1x1x32x256xf32>
    %1 = vector.shape_cast %0 : vector<1x1x32x256xf32> to vector<32x256xf32>
    %cst = arith.constant dense<0.000000e+00> : vector<256xf32>
    %2 = vector.multi_reduction <add>, %1, %cst [0] : vector<32x256xf32> to vector<256xf32>
    %3 = vector.shape_cast %2 : vector<256xf32> to vector<1x256xf32>
    %cst_3 = arith.constant 3.200000e+01 : f32
    %4 = vector.broadcast %cst_3 : f32 to vector<1x256xf32>
    %5 = arith.divf %3, %4 : vector<1x256xf32>
    %6 = vector.broadcast %5 : vector<1x256xf32> to vector<32x256xf32>
    %7 = arith.subf %1, %6 : vector<32x256xf32>
    %8 = arith.mulf %7, %7 : vector<32x256xf32>
    %cst_4 = arith.constant dense<0.000000e+00> : vector<256xf32>
    %9 = vector.multi_reduction <add>, %8, %cst_4 [0] : vector<32x256xf32> to vector<256xf32>
    %10 = vector.shape_cast %9 : vector<256xf32> to vector<1x256xf32>
    %cst_5 = arith.constant 3.200000e+01 : f32
    %11 = vector.broadcast %cst_5 : f32 to vector<1x256xf32>
    %12 = arith.divf %10, %11 : vector<1x256xf32>
    %cst_6 = arith.constant 9.99999974E-6 : f32
    %13 = vector.broadcast %cst_6 : f32 to vector<1x256xf32>
    %14 = arith.addf %12, %13 : vector<1x256xf32>
    %15 = math.rsqrt %14 : vector<1x256xf32>
    %16 = vector.broadcast %15 : vector<1x256xf32> to vector<32x256xf32>
    %17 = arith.mulf %7, %16 : vector<32x256xf32>
    %c0_7 = arith.constant 0 : index
    %c0_8 = arith.constant 0 : index
    %18 = vector.load %arg4[%c0_7, %c0_8] : memref<32x1xf32, #tpu.memory_space<vmem>>, vector<32x1xf32>
    %19 = vector.broadcast %18 : vector<32x1xf32> to vector<32x256xf32>
    %20 = arith.mulf %17, %19 : vector<32x256xf32>
    %c0_9 = arith.constant 0 : index
    %c0_10 = arith.constant 0 : index
    %21 = vector.load %arg5[%c0_9, %c0_10] : memref<32x1xf32, #tpu.memory_space<vmem>>, vector<32x1xf32>
    %22 = vector.broadcast %21 : vector<32x1xf32> to vector<32x256xf32>
    %23 = arith.addf %20, %22 : vector<32x256xf32>
    %c0_11 = arith.constant 0 : index
    %c0_12 = arith.constant 0 : index
    %c0_13 = arith.constant 0 : index
    %24 = vector.load %arg6[%c0_11, %c0_12, %c0_13] : memref<1x32x256xf32, #tpu.memory_space<vmem>>, vector<1x32x256xf32>
    %25 = vector.shape_cast %24 : vector<1x32x256xf32> to vector<32x256xf32>
    %26 = vector.shape_cast %23 : vector<32x256xf32> to vector<1x32x256xf32>
    tpu.vector_store %arg6[%c0_11, %c0_12, %c0_13], %26 {strides = array<i32>} : memref<1x32x256xf32, #tpu.memory_space<vmem>>, vector<1x32x256xf32>,
    return
  }
  func.func @transform_0(%arg0: i32, %arg1: i32, %arg2: i32) -> (i32, i32, i32, i32) {
    %c0_i32 = arith.constant 0 : i32
    %c0_i32_0 = arith.constant 0 : i32
    return %arg0, %arg1, %c0_i32, %arg2 : i32, i32, i32, i32
  }
  func.func @transform_1(%arg0: i32, %arg1: i32, %arg2: i32) -> (i32, i32) {
    %c0_i32 = arith.constant 0 : i32
    %c0_i32_0 = arith.constant 0 : i32
    %c0_i32_1 = arith.constant 0 : i32
    return %c0_i32, %c0_i32_0 : i32, i32
  }
  func.func @transform_2(%arg0: i32, %arg1: i32, %arg2: i32) -> (i32, i32) {
    %c0_i32 = arith.constant 0 : i32
    %c0_i32_0 = arith.constant 0 : i32
    %c0_i32_1 = arith.constant 0 : i32
    return %c0_i32, %c0_i32_0 : i32, i32
  }
  func.func @transform_3(%arg0: i32, %arg1: i32, %arg2: i32) -> (i32, i32, i32) {
    %c1_i32 = arith.constant 1 : i32
    %0 = arith.muli %arg1, %c1_i32 : i32
    %1 = arith.addi %0, %arg2 : i32
    %c0_i32 = arith.constant 0 : i32
    %c0_i32_0 = arith.constant 0 : i32
    return %arg0, %c0_i32, %1 : i32, i32, i32
  }
}

</mosaic_0001>

<llo_original>
// kernel: tpu_custom_call.1
$region0: #{tpu_custom_call.1}
  #allocation0 [shape = 'u32[]', space=smem, size = 0x4, offset = 0x4, fixed_abs, tag = 'smem constant byte address 0x4 - core index']
  #allocation1 [shape = 'u32[144,128]{1,0:T(1,128)}', space=vmem, size = 0x12000, scoped, tag = 'internal scratch']
  %s0 = inlined_call_operand.hbm [shape: f32[2,3,32,256], index: 0, kind: input, shape index: {}]
  %s1 = inlined_call_operand.vmem [shape: f32[32,1], index: 1, kind: input, shape index: {}]
  %s2 = inlined_call_operand.vmem [shape: f32[32,1], index: 2, kind: input, shape index: {}]
  %s3 = inlined_call_operand.hbm [shape: f32[2,32,768], index: 3, kind: output, shape index: {}]
  %s4 = sld [smem:[#allocation0]]
  $region49: #{tpu_custom_call.1} parent=0
    _
  %s6 = ssub.s32 1, %s4
  %s7 = scalar_select 0, %s6, %s4
  $region1: #{tpu_custom_call.1} parent=0
    #allocation2 [shape = 'u8[65536]{0}', space=vmem, size = 0x10000, scoped, tag = 'input window, operand 0']
    #allocation3 [shape = 's32[2]{0}', space=sflag, size = 0x8, scoped, tag = 'scoped memory for tpu_custom_call.1']
    #allocation4 [shape = 's32[2]{0}', space=sflag, size = 0x8, scoped, tag = 'scoped memory for tpu_custom_call.1']
    #allocation5 [shape = 'u8[65536]{0}', space=vmem, size = 0x10000, scoped, tag = 'output window, operand 0']
    %8 = vsyncpa [#allocation3], 0
    %s9 = scalar_lea.sflag [#allocation3], 1
    %10 = vsyncpa %s9, 0
    %11 = vsyncpa [#allocation4], 0
    %s12 = scalar_lea.sflag [#allocation4], 1
    %13 = vsyncpa %s12, 0
    loop: start=0, step=1, limit=8
    $region2: #{tpu_custom_call.1} parent=1 // loop_pre_header
      _
    $region3: #{tpu_custom_call.1} parent=1 // loop_header
      %s15 = sphi 0, %s19
      %p16 = scmp.ge.s32.totalorder %s15, 8
      %s22 = sphi 0, %s41
      %s23 = sphi 0, %s37
      %s24 = sphi 0, %s33
      %s25 = sphi 0, %s22
      %s26 = sphi 0, %s23
      %s27 = sphi 0, %s24
      %s28 = sphi 0, %s25
      %s29 = sphi 0, %s26
      %s30 = sphi 0, %s27
      %s48 = sphi 0, %s50
      %s51 = sphi 0, %s48
      %s52 = sphi 0, %s51
      %s68 = sphi 0, %s52
      %s72 = sphi 0, %s72
      %s74 = sphi 0, %s72
      %s75 = sphi 0, %s74
      %s89 = sphi 0, %s75
      %s93 = sphi 0, %s93
      %s95 = sphi 0, %s93
      %s96 = sphi 0, %s95
      %s110 = sphi 0, %s96
      %s120 = sphi 0, %s122
      %s123 = sphi 0, %s120
      %s124 = sphi 0, %s123
      %s140 = sphi 0, %s124
    $region4: #{tpu_custom_call.1} parent=1 // loop_header_branch
      %18 = sbr.rel (%p16) target = $region8
    $region5: #{tpu_custom_call.1} parent=1 // loop_body
      %s20 = ssub.s32 %s15, 1
      %s21 = ssub.s32 %s15, 2
      %s31 = sadd.s32 1, %s24
      %p32 = scmp.ge.s32.totalorder %s31, 1
      %s33 = scalar_select %p32, 0, %s31
      %s34 = sadd.s32 1, %s23
      %s35 = scalar_select %p32, %s34, %s23
      %p36 = scmp.ge.s32.totalorder %s35, 3
      %s37 = scalar_select %p36, 0, %s35
      %s38 = sadd.s32 1, %s22
      %s39 = scalar_select %p36, %s38, %s22
      %p40 = scmp.ge.s32.totalorder %s39, 2
      %s41 = scalar_select %p40, 0, %s39
      %s42 = ssub.s32 %s22, %s41
      %s43 = ssub.s32 %s23, %s37
      %s44 = sor.u32 %s42, %s43
      %s45 = ssub.s32 %s24, %s33
      %s46 = sor.u32 %s44, %s45
      %p47 = scmp.eq.s32.totalorder %s46, 0
      %s49 = sadd.s32 %s48, 1
      %s50 = scalar_select %p47, %s48, %s49
      %p53 = pneg %p47
      %p54 = scmp.eq.s32.totalorder %s15, 5
      %p55 = por %p53, %p54
      %p56 = scmp.ne.s32.totalorder %s48, %s51
      %p57 = scmp.eq.s32.totalorder %s15, 0
      %p58 = por %p56, %p57
      %p59 = scmp.ne.s32.totalorder %s48, %s51
      %p60 = scmp.eq.s32.totalorder %s20, 5
      %p61 = por %p59, %p60
      %p62 = scmp.ne.s32.totalorder %s51, %s52
      %p63 = scmp.eq.s32.totalorder %s20, 0
      %p64 = por %p62, %p63
      %p65 = scmp.ne.s32.totalorder %s51, %s52
      %p66 = scmp.eq.s32.totalorder %s21, 5
      %p67 = por %p65, %p66
      %p69 = scmp.ne.s32.totalorder %s52, %s68
      %p70 = scmp.eq.s32.totalorder %s21, 0
      %p71 = por %p69, %p70
      %s73 = sadd.s32 %s72, 1
      %p76 = scmp.eq.s32.totalorder %s15, 5
      %p77 = scmp.ne.s32.totalorder %s72, %s74
      %p78 = scmp.eq.s32.totalorder %s15, 0
      %p79 = por %p77, %p78
      %p80 = scmp.ne.s32.totalorder %s72, %s74
      %p81 = scmp.eq.s32.totalorder %s20, 5
      %p82 = por %p80, %p81
      %p83 = scmp.ne.s32.totalorder %s74, %s75
      %p84 = scmp.eq.s32.totalorder %s20, 0
      %p85 = por %p83, %p84
      %p86 = scmp.ne.s32.totalorder %s74, %s75
      %p87 = scmp.eq.s32.totalorder %s21, 5
      %p88 = por %p86, %p87
      %p90 = scmp.ne.s32.totalorder %s75, %s89
      %p91 = scmp.eq.s32.totalorder %s21, 0
      %p92 = por %p90, %p91
      %s94 = sadd.s32 %s93, 1
      %p97 = scmp.eq.s32.totalorder %s15, 5
      %p98 = scmp.ne.s32.totalorder %s93, %s95
      %p99 = scmp.eq.s32.totalorder %s15, 0
      %p100 = por %p98, %p99
      %p101 = scmp.ne.s32.totalorder %s93, %s95
      %p102 = scmp.eq.s32.totalorder %s20, 5
      %p103 = por %p101, %p102
      %p104 = scmp.ne.s32.totalorder %s95, %s96
      %p105 = scmp.eq.s32.totalorder %s20, 0
      %p106 = por %p104, %p105
      %p107 = scmp.ne.s32.totalorder %s95, %s96
      %p108 = scmp.eq.s32.totalorder %s21, 5
      %p109 = por %p107, %p108
      %p111 = scmp.ne.s32.totalorder %s96, %s110
      %p112 = scmp.eq.s32.totalorder %s21, 0
      %p113 = por %p111, %p112
      %s114 = sadd.s32 %s23, %s24
      %s115 = sadd.s32 %s37, %s33
      %s116 = ssub.s32 %s22, %s41
      %s117 = ssub.s32 %s114, %s115
      %s118 = sor.u32 %s116, %s117
      %p119 = scmp.eq.s32.totalorder %s118, 0
      %s121 = sadd.s32 %s120, 1
      %s122 = scalar_select %p119, %s120, %s121
      %p125 = pneg %p119
      %p126 = scmp.eq.s32.totalorder %s15, 5
      %p127 = por %p125, %p126
      %p128 = scmp.ne.s32.totalorder %s120, %s123
      %p129 = scmp.eq.s32.totalorder %s15, 0
      %p130 = por %p128, %p129
      %p131 = scmp.ne.s32.totalorder %s120, %s123
      %p132 = scmp.eq.s32.totalorder %s20, 5
      %p133 = por %p131, %p132
      %p134 = scmp.ne.s32.totalorder %s123, %s124
      %p135 = scmp.eq.s32.totalorder %s20, 0
      %p136 = por %p134, %p135
      %p137 = scmp.ne.s32.totalorder %s123, %s124
      %p138 = scmp.eq.s32.totalorder %s21, 5
      %p139 = por %p137, %p138
      %p141 = scmp.ne.s32.totalorder %s124, %s140
      %p142 = scmp.eq.s32.totalorder %s21, 0
      %p143 = por %p141, %p142
      %p144 = scmp.le.s32.totalorder 1, %s15
      %p145 = scmp.lt.s32.totalorder %s15, 7
      %p146 = pnand %p144, %p145
      %p147 = pneg %p146
      // Predicated region
      $region9: #{tpu_custom_call.1} parent=5 // pred_check
        _
      $region10: #{tpu_custom_call.1} parent=5 // pred_check_branch
        %149 = sbr.rel (%p146) target = $region12
      $region11: #{tpu_custom_call.1} parent=5 // pred_region
        %s150 = ssub.s32 %s15, 1
        // Predicated region
        $region13: #{tpu_custom_call.1} parent=11 // pred_check
          %p151 = pneg %p85
        $region14: #{tpu_custom_call.1} parent=11 // pred_check_branch
          %153 = sbr.rel (%p151) target = $region16
        $region15: #{tpu_custom_call.1} parent=11 // pred_region
          _
        $region16: #{tpu_custom_call.1} parent=11 // pred_fallthru
          _
        // Predicated region
        $region17: #{tpu_custom_call.1} parent=11 // pred_check
          %p154 = pneg %p106
        $region18: #{tpu_custom_call.1} parent=11 // pred_check_branch
          %156 = sbr.rel (%p154) target = $region20
        $region19: #{tpu_custom_call.1} parent=11 // pred_region
          _
        $region20: #{tpu_custom_call.1} parent=11 // pred_fallthru
          _
      $region12: #{tpu_custom_call.1} parent=5 // pred_fallthru
        _
      %p157 = scmp.lt.s32.totalorder %s15, 6
      // Predicated region
      $region21: #{tpu_custom_call.1} parent=5 // pred_check
        %p158 = pneg %p157
      $region22: #{tpu_custom_call.1} parent=5 // pred_check_branch
        %160 = sbr.rel (%p158) target = $region24
      $region23: #{tpu_custom_call.1} parent=5 // pred_region
        // Predicated region
        $region25: #{tpu_custom_call.1} parent=23 // pred_check
          %p161 = pneg %p58
        $region26: #{tpu_custom_call.1} parent=23 // pred_check_branch
          %163 = sbr.rel (%p161) target = $region28
        $region27: #{tpu_custom_call.1} parent=23 // pred_region
          %s164 = sand.u32 %s48, 1
          %s165 = scalar_lea.sflag [#allocation3], %s164
          %s166 = sand.u32 %s48, 1
          %s167 = smul.addr %s166, 64
          %s168 = scalar_lea.vmem [#allocation2], %s167
          %s169 = smul.u32 2, %s24
          %s171 = ssub.s32 1024, 1024
          %172 = vsyncadd %s165, %s171
          %s173 = smul.addr %s23, 8
          %s174 = sadd.s32 %s169, %s173
          %s175 = smul.addr %s22, 24
          %s176 = sadd.s32 %s174, %s175
          %s177 = smul.addr %s176, 128
          %s178 = scalar_lea.hbm %s0, %s177
          %s179 = sshll.u32 %s168, 4
          %s180 = int_to_ptr.vmem [resolvable:$true] %s179
          %185 = dma.hbm_to_vmem [thread:$0]  %s178, 1024, %s180, %s165, 256, 256, 16
        $region28: #{tpu_custom_call.1} parent=23 // pred_fallthru
          _
      $region24: #{tpu_custom_call.1} parent=5 // pred_fallthru
        _
      %p186 = scmp.le.s32.totalorder 1, %s15
      %p187 = scmp.lt.s32.totalorder %s15, 7
      %p188 = pnand %p186, %p187
      %p189 = pneg %p188
      // Predicated region
      $region29: #{tpu_custom_call.1} parent=5 // pred_check
        _
      $region30: #{tpu_custom_call.1} parent=5 // pred_check_branch
        %191 = sbr.rel (%p188) target = $region32
      $region31: #{tpu_custom_call.1} parent=5 // pred_region
        %s192 = ssub.s32 %s15, 1
        %s193 = sand.u32 %s51, 1
        %s194 = scalar_lea.sflag [#allocation3], %s193
        %s195 = sand.u32 %s51, 1
        %s196 = smul.addr %s195, 64
        %s197 = scalar_lea.vmem [#allocation2], %s196
        // Predicated region
        $region33: #{tpu_custom_call.1} parent=31 // pred_check
          %p198 = pneg %p64
        $region34: #{tpu_custom_call.1} parent=31 // pred_check_branch
          %200 = sbr.rel (%p198) target = $region36
        $region35: #{tpu_custom_call.1} parent=31 // pred_region
          %201 = dma.done %s194, 1024
        $region36: #{tpu_custom_call.1} parent=31 // pred_fallthru
          _
        %s202 = sand.u32 %s51, 1
        %s203 = scalar_lea.sflag [#allocation3], %s202
        %s204 = sand.u32 %s51, 1
        %s205 = smul.addr %s204, 64
        %s206 = scalar_lea.vmem [#allocation2], %s205
        %p207 = pneg %p64
        %p208 = pneg %p61
        %p209 = pneg %p85
        %p210 = pneg %p82
        %p211 = pneg %p106
        %p212 = pneg %p103
        %p213 = pneg %p136
        %p214 = pneg %p133
        %s215 = sand.u32 %s123, 1
        %s216 = scalar_lea.sflag [#allocation4], %s215
        %s217 = sand.u32 %s123, 1
        %s218 = smul.addr %s217, 64
        %s219 = scalar_lea.vmem [#allocation5], %s218
        %s220 = smul.u32 2, %s27
        %s221 = sadd.s32 %s26, %s27
        %s222 = smul.u32 2, %s221
        %v223 = vld [vmem:[%s197] sm:$0xff]
        %v224 = vld [vmem:[%s197 + $0x8] sm:$0xff]
        %v225 = vld [vmem:[%s197 + $0x10] sm:$0xff]
        %v226 = vld [vmem:[%s197 + $0x18] sm:$0xff]
        %v227 = vld [vmem:[%s197 + $0x20] sm:$0xff]
        %v228 = vld [vmem:[%s197 + $0x28] sm:$0xff]
        %v229 = vld [vmem:[%s197 + $0x30] sm:$0xff]
        %v230 = vld [vmem:[%s197 + $0x38] sm:$0xff]
        %v231 = vadd.f32 %v223, %v225
        %v232 = vadd.f32 %v231, %v227
        %v233 = vadd.f32 %v232, %v229
        %v234 = vrot.slane %v233, 4
        %v235 = vadd.f32 %v233, %v234
        %v236 = vrot.slane %v235, 2
        %v237 = vadd.f32 %v235, %v236
        %v238 = vrot.slane %v237, 1
        %v239 = vadd.f32 %v237, %v238
        %v240 = vadd.f32 %v224, %v226
        %v241 = vadd.f32 %v240, %v228
        %v242 = vadd.f32 %v241, %v230
        %v243 = vrot.slane %v242, 4
        %v244 = vadd.f32 %v242, %v243
        %v245 = vrot.slane %v244, 2
        %v246 = vadd.f32 %v244, %v245
        %v247 = vrot.slane %v246, 1
        %v248 = vadd.f32 %v246, %v247
        %v249 = vrcp.pop 32.0
        %v250 = vmul.f32 %v239, %v249
        %v251 = vmul.f32 %v248, %v249
        %v252 = vsub.f32 %v223, %v250
        %v253 = vsub.f32 %v224, %v251
        %v254 = vsub.f32 %v225, %v250
        %v255 = vsub.f32 %v226, %v251
        %v256 = vsub.f32 %v227, %v250
        %v257 = vsub.f32 %v228, %v251
        %v258 = vsub.f32 %v229, %v250
        %v259 = vsub.f32 %v230, %v251
        %v260 = vmul.f32 %v252, %v252
        %v261 = vmul.f32 %v253, %v253
        %v262 = vmul.f32 %v254, %v254
        %v263 = vmul.f32 %v255, %v255
        %v264 = vmul.f32 %v256, %v256
        %v265 = vmul.f32 %v257, %v257
        %v266 = vmul.f32 %v258, %v258
        %v267 = vmul.f32 %v259, %v259
        %v268 = vadd.f32 %v260, %v262
        %v269 = vadd.f32 %v268, %v264
        %v270 = vadd.f32 %v269, %v266
        %v271 = vrot.slane %v270, 4
        %v272 = vadd.f32 %v270, %v271
        %v273 = vrot.slane %v272, 2
        %v274 = vadd.f32 %v272, %v273
        %v275 = vrot.slane %v274, 1
        %v276 = vadd.f32 %v274, %v275
        %v277 = vadd.f32 %v261, %v263
        %v278 = vadd.f32 %v277, %v265
        %v279 = vadd.f32 %v278, %v267
        %v280 = vrot.slane %v279, 4
        %v281 = vadd.f32 %v279, %v280
        %v282 = vrot.slane %v281, 2
        %v283 = vadd.f32 %v281, %v282
        %v284 = vrot.slane %v283, 1
        %v285 = vadd.f32 %v283, %v284
        %v286 = vmul.f32 %v276, %v249
        %v287 = vmul.f32 %v285, %v249
        %v288 = vadd.f32 %v286, 1e-05
        %v289 = vadd.f32 %v287, 1e-05
        %v290 = vrsqrt.pop %v288
        %v291 = vrsqrt.pop %v289
        %v292 = vmul.f32 %v252, %v290
        %v293 = vmul.f32 %v253, %v291
        %v294 = vmul.f32 %v254, %v290
        %v295 = vmul.f32 %v255, %v291
        %v296 = vmul.f32 %v256, %v290
        %v297 = vmul.f32 %v257, %v291
        %v298 = vmul.f32 %v258, %v290
        %v299 = vmul.f32 %v259, %v291
        %v300 = vld [vmem:[%s1] sm:$0xff]
        %v301 = vld [vmem:[%s1 + $0x8] sm:$0xff]
        %v302 = vld [vmem:[%s1 + $0x10] sm:$0xff]
        %v303 = vld [vmem:[%s1 + $0x18] sm:$0xff]
        %305 = vset.pattern.permute.xlu0 0
        %306 = vperm.xlu0 %305, %v300
        %v307 = vpop.permute.xlu0 %306
        %310 = vset.pattern.permute.xlu0 0
        %311 = vperm.xlu0 %310, %v301
        %v312 = vpop.permute.xlu0 %311
        %315 = vset.pattern.permute.xlu0 0
        %316 = vperm.xlu0 %315, %v302
        %v317 = vpop.permute.xlu0 %316
        %320 = vset.pattern.permute.xlu0 0
        %321 = vperm.xlu0 %320, %v303
        %v322 = vpop.permute.xlu0 %321
        %v324 = vmul.f32 %v292, %v307
        %v325 = vmul.f32 %v293, %v307
        %v326 = vmul.f32 %v294, %v312
        %v327 = vmul.f32 %v295, %v312
        %v328 = vmul.f32 %v296, %v317
        %v329 = vmul.f32 %v297, %v317
        %v330 = vmul.f32 %v298, %v322
        %v331 = vmul.f32 %v299, %v322
        %v332 = vld [vmem:[%s2] sm:$0xff]
        %v333 = vld [vmem:[%s2 + $0x8] sm:$0xff]
        %v334 = vld [vmem:[%s2 + $0x10] sm:$0xff]
        %v335 = vld [vmem:[%s2 + $0x18] sm:$0xff]
        %337 = vset.pattern.permute.xlu0 0
        %338 = vperm.xlu0 %337, %v332
        %v339 = vpop.permute.xlu0 %338
        %342 = vset.pattern.permute.xlu0 0
        %343 = vperm.xlu0 %342, %v333
        %v344 = vpop.permute.xlu0 %343
        %347 = vset.pattern.permute.xlu0 0
        %348 = vperm.xlu0 %347, %v334
        %v349 = vpop.permute.xlu0 %348
        %352 = vset.pattern.permute.xlu0 0
        %353 = vperm.xlu0 %352, %v335
        %v354 = vpop.permute.xlu0 %353
        %v356 = vadd.f32 %v324, %v339
        %v357 = vadd.f32 %v325, %v339
        %v358 = vadd.f32 %v326, %v344
        %v359 = vadd.f32 %v327, %v344
        %v360 = vadd.f32 %v328, %v349
        %v361 = vadd.f32 %v329, %v349
        %v362 = vadd.f32 %v330, %v354
        %v363 = vadd.f32 %v331, %v354
        %364 = vst [vmem:[%s219] sm:$0xff] %v356
        %365 = vst [vmem:[%s219 + $0x8] sm:$0xff] %v357
        %366 = vst [vmem:[%s219 + $0x10] sm:$0xff] %v358
        %367 = vst [vmem:[%s219 + $0x18] sm:$0xff] %v359
        %368 = vst [vmem:[%s219 + $0x20] sm:$0xff] %v360
        %369 = vst [vmem:[%s219 + $0x28] sm:$0xff] %v361
        %370 = vst [vmem:[%s219 + $0x30] sm:$0xff] %v362
        %371 = vst [vmem:[%s219 + $0x38] sm:$0xff] %v363
        %s372 = sand.u32 %s123, 1
        %s373 = scalar_lea.sflag [#allocation4], %s372
        %s374 = sand.u32 %s123, 1
        %s375 = smul.addr %s374, 64
        %s376 = scalar_lea.vmem [#allocation5], %s375
        // Predicated region
        $region37: #{tpu_custom_call.1} parent=31 // pred_check
          %p377 = pneg %p133
        $region38: #{tpu_custom_call.1} parent=31 // pred_check_branch
          %379 = sbr.rel (%p377) target = $region40
        $region39: #{tpu_custom_call.1} parent=31 // pred_region
          %s380 = sadd.s32 %s26, %s27
          %s381 = smul.u32 2, %s380
          %s383 = ssub.s32 1024, 1024
          %384 = vsyncadd %s373, %s383
          %s385 = smul.addr %s25, 24
          %s386 = sadd.s32 %s381, %s385
          %s387 = smul.addr %s386, 128
          %s388 = scalar_lea.hbm %s3, %s387
          %s389 = sshll.u32 %s376, 4
          %s390 = int_to_ptr.vmem [resolvable:$true] %s389
          %395 = dma.vmem_to_hbm [thread:$0]  %s390, 1024, %s388, %s373, 256, 768, 16
        $region40: #{tpu_custom_call.1} parent=31 // pred_fallthru
          _
      $region32: #{tpu_custom_call.1} parent=5 // pred_fallthru
        _
      %p396 = scmp.le.s32.totalorder 2, %s15
      // Predicated region
      $region41: #{tpu_custom_call.1} parent=5 // pred_check
        %p397 = pneg %p396
      $region42: #{tpu_custom_call.1} parent=5 // pred_check_branch
        %399 = sbr.rel (%p397) target = $region44
      $region43: #{tpu_custom_call.1} parent=5 // pred_region
        %s400 = ssub.s32 %s15, 2
        // Predicated region
        $region45: #{tpu_custom_call.1} parent=43 // pred_check
          %p401 = pneg %p139
        $region46: #{tpu_custom_call.1} parent=43 // pred_check_branch
          %403 = sbr.rel (%p401) target = $region48
        $region47: #{tpu_custom_call.1} parent=43 // pred_region
          %s404 = sand.u32 %s124, 1
          %s405 = scalar_lea.sflag [#allocation4], %s404
          %s406 = sand.u32 %s124, 1
          %s407 = smul.addr %s406, 64
          %s408 = scalar_lea.vmem [#allocation5], %s407
          %409 = dma.done %s405, 1024
        $region48: #{tpu_custom_call.1} parent=43 // pred_fallthru
          _
      $region44: #{tpu_custom_call.1} parent=5 // pred_fallthru
        _
    $region6: #{tpu_custom_call.1} parent=1 // loop_footer
      %s19 = sadd.s32 1, %s15
    $region7: #{tpu_custom_call.1} parent=1 // loop_footer_branch
      %14 = sbr.rel target = $region3
    $region8: #{tpu_custom_call.1} parent=1 // loop_exit
      _
    %410 = vsyncpa [#allocation3], 1
    %s411 = scalar_lea.sflag [#allocation3], 1
    %412 = vsyncpa %s411, 1
    %413 = vsyncpa [#allocation4], 1
    %s414 = scalar_lea.sflag [#allocation4], 1
    %415 = vsyncpa %s414, 1

</llo_original>
